<compile_context>
chip_gen: v7x
topology: tpu7x:2x2x1
jax: 0.10.0
libtpu: 0.0.40
codegen_flags: <defaults>
</compile_context>

<pallas_src>
import jax
import jax.numpy as jnp
from jax.experimental import pallas as pl
from jax.experimental.pallas import tpu as pltpu


def _fib_kan_kernel(x_ref, w_ref, o_ref, basis_ref):
    # x_ref:     (TB, I)          input tile
    # w_ref:     (degree*I, O)    coefficient slab (degree-major rows), MXU dtype
    # o_ref:     (TB, O)          output tile (f32)
    # basis_ref: (TB, degree*I)   f32 VMEM scratch for the Fibonacci basis
    i_dim = x_ref.shape[1]
    k_dim = basis_ref.shape[1]
    degree = k_dim // i_dim

    x = jnp.tanh(x_ref[...].astype(jnp.float32))

    # Fibonacci-polynomial recurrence. Degree 0 is identically zero, so its
    # coefficients were dropped from w_ref and the basis starts at degree 1.
    fib_prev2 = jnp.zeros_like(x)                       # F_0(x) = 0
    fib_prev = jnp.ones_like(x)                         # F_1(x) = 1
    basis_ref[:, 0:i_dim] = fib_prev
    for d in range(2, degree + 1):
        fib_cur = x * fib_prev + fib_prev2              # F_d = x*F_{d-1} + F_{d-2}
        basis_ref[:, (d - 1) * i_dim:d * i_dim] = fib_cur
        fib_prev2, fib_prev = fib_prev, fib_cur

    # Single fused matmul with K = degree*I; f32 accumulation on the MXU.
    basis = basis_ref[...].astype(w_ref.dtype)
    o_ref[...] = jnp.dot(
        basis, w_ref[...], preferred_element_type=jnp.float32
    ).astype(o_ref.dtype)


def prepare_fib_coeffs(fib_coeffs, mxu_dtype=jnp.bfloat16):
    """(input_dim, output_dim, degree+1) torch-layout parameter
       -> (degree*input_dim, output_dim) matmul slab in MXU dtype.

    Row (d-1)*input_dim + i holds fib_coeffs[i, :, d] for d = 1..degree (the
    degree-0 Fibonacci polynomial is 0, so its coefficients are dropped).
    Call once at parameter-load time, not per forward pass.
    """
    input_dim, output_dim, deg_p1 = fib_coeffs.shape
    degree = deg_p1 - 1
    if degree == 0:
        return jnp.zeros((0, output_dim), mxu_dtype)
    w = jnp.transpose(fib_coeffs, (2, 0, 1))[1:]        # (degree, I, O)
    return w.reshape(degree * input_dim, output_dim).astype(mxu_dtype)


def fibonacci_kan_layer(x, w_prepared, *, batch_tile=512):
    """x: any shape with trailing dim == input_dim (flattened like torch view).
    w_prepared: output of prepare_fib_coeffs.
    Returns (batch_flat, output_dim) float32."""
    input_dim = x.shape[-1]
    k_dim, output_dim = w_prepared.shape
    x2 = x.reshape(-1, input_dim)
    b_flat = x2.shape[0]

    if k_dim == 0:      # degree == 0: basis is identically zero.
        return jnp.zeros((b_flat, output_dim), jnp.float32)

    # Batch tile: either the whole (small) batch in one block, or a large
    # multiple of 8 so the MXU M dimension and per-step overhead amortize.
    if b_flat <= batch_tile:
        tb = b_flat
    else:
        tb = max(8, (batch_tile // 8) * 8)
    grid = (pl.cdiv(b_flat, tb),)

    return pl.pallas_call(
        _fib_kan_kernel,
        out_shape=jax.ShapeDtypeStruct((b_flat, output_dim), jnp.float32),
        grid_spec=pltpu.PrefetchScalarGridSpec(
            num_scalar_prefetch=0,
            grid=grid,
            in_specs=[
                pl.BlockSpec((tb, input_dim), lambda i: (i, 0)),
                # Constant index map -> coefficient slab stays resident in VMEM
                # across the whole grid. (On v7x with tight VMEM, one could add
                # pipeline_mode=pl.Buffered(1) here to drop its double buffer.)
                pl.BlockSpec((k_dim, output_dim), lambda i: (0, 0)),
            ],
            out_specs=pl.BlockSpec((tb, output_dim), lambda i: (i, 0)),
            scratch_shapes=[pltpu.VMEM((tb, k_dim), jnp.float32)],
        ),
        compiler_params=pltpu.CompilerParams(
            dimension_semantics=("parallel",)),
    )(x2, w_prepared)


def fibonacci_kan_reference(x, fib_coeffs):
    """Pure-JAX reference mirroring the PyTorch forward exactly (f32)."""
    input_dim, output_dim, deg_p1 = fib_coeffs.shape
    degree = deg_p1 - 1
    x2 = jnp.tanh(x.reshape(-1, input_dim).astype(jnp.float32))
    fibs = [jnp.zeros_like(x2)]
    if degree > 0:
        fibs.append(jnp.ones_like(x2))
    for i in range(2, degree + 1):
        fibs.append(x2 * fibs[i - 1] + fibs[i - 2])
    fib = jnp.stack(fibs, axis=-1)                      # (B, I, D+1)
    return jnp.einsum('bid,iod->bo', fib, fib_coeffs.astype(jnp.float32),
                      precision=jax.lax.Precision.HIGHEST)


if __name__ == "__main__":
    input_dim = 16
    output_dim = 32
    degree = 4

    key = jax.random.PRNGKey(0)
    k_x, k_c = jax.random.split(key)

    # Input: (4, 8, 16) -> flattened internally to (32, 16), like torch view.
    x = jax.random.normal(k_x, (4, 8, input_dim), dtype=jnp.float32)

    # Deterministic init matching nn.init.normal_(std = 1/(input_dim*(degree+1))).
    std = 1.0 / (input_dim * (degree + 1))
    fib_coeffs = std * jax.random.normal(
        k_c, (input_dim, output_dim, degree + 1), dtype=jnp.float32)

    y_ref = fibonacci_kan_reference(x, fib_coeffs)

    layer = jax.jit(fibonacci_kan_layer)

    # f32 MXU operands: tight check against the f32 reference.
    w_f32 = prepare_fib_coeffs(fib_coeffs, mxu_dtype=jnp.float32)
    y_f32 = jax.block_until_ready(layer(x, w_f32))
    assert y_f32.shape == (32, output_dim), y_f32.shape
    assert jnp.allclose(y_f32, y_ref, atol=1e-5, rtol=1e-5), \
        float(jnp.max(jnp.abs(y_f32 - y_ref)))

    # bf16 MXU operands (fast path on all TPU generations): looser tolerance.
    w_bf16 = prepare_fib_coeffs(fib_coeffs, mxu_dtype=jnp.bfloat16)
    y_bf16 = jax.block_until_ready(layer(x, w_bf16))
    assert y_bf16.shape == (32, output_dim), y_bf16.shape
    assert jnp.allclose(y_bf16, y_ref, atol=2e-2, rtol=2e-2), \
        float(jnp.max(jnp.abs(y_bf16 - y_ref)))

    print("KERNEL_OK")
</pallas_src>

<mosaic_0001>
module attributes {stable_mosaic.version = 11 : i64} {
  func.func @_fib_kan_kernel(%arg0: i32, %arg1: memref<32x16xf32, #tpu.memory_space<vmem>>, %arg2: memref<64x32xf32, #tpu.memory_space<vmem>>, %arg3: memref<32x32xf32, #tpu.memory_space<vmem>>, %arg4: memref<32x64xf32, #tpu.memory_space<vmem>>) attributes {dimension_semantics = [#tpu.dimension_semantics<parallel>], iteration_bounds = array<i64: 1>, scalar_prefetch = 0 : i64, scratch_operands = 1 : i64, tpu.core_type = #tpu.core_type<tc>, window_params = [{transform_indices = @transform_0, window_bounds = array<i64: 32, 16>}, {pipeline_mode = #tpu.pipeline_mode<synchronous>, transform_indices = @transform_1, window_bounds = array<i64: 64, 32>}, {transform_indices = @transform_2, window_bounds = array<i64: 32, 32>}]} {
    %c0 = arith.constant 0 : index
    %c0_0 = arith.constant 0 : index
    %0 = vector.load %arg1[%c0, %c0_0] : memref<32x16xf32, #tpu.memory_space<vmem>>, vector<32x16xf32>
    %1 = math.tanh %0 : vector<32x16xf32>
    %cst = arith.constant 0.000000e+00 : f32
    %2 = vector.broadcast %cst : f32 to vector<32x16xf32>
    %cst_1 = arith.constant 1.000000e+00 : f32
    %3 = vector.broadcast %cst_1 : f32 to vector<32x16xf32>
    %c0_2 = arith.constant 0 : index
    %c0_3 = arith.constant 0 : index
    %4 = vector.load %arg4[%c0_2, %c0_3] : memref<32x64xf32, #tpu.memory_space<vmem>>, vector<32x16xf32>
    tpu.vector_store %arg4[%c0_2, %c0_3], %3 {strides = array<i32>} : memref<32x64xf32, #tpu.memory_space<vmem>>, vector<32x16xf32>,
    %5 = arith.mulf %1, %3 : vector<32x16xf32>
    %6 = arith.addf %5, %2 : vector<32x16xf32>
    %c0_4 = arith.constant 0 : index
    %c16 = arith.constant 16 : index
    %7 = vector.load %arg4[%c0_4, %c16] : memref<32x64xf32, #tpu.memory_space<vmem>>, vector<32x16xf32>
    tpu.vector_store %arg4[%c0_4, %c16], %6 {strides = array<i32>} : memref<32x64xf32, #tpu.memory_space<vmem>>, vector<32x16xf32>,
    %8 = arith.mulf %1, %6 : vector<32x16xf32>
    %9 = arith.addf %8, %3 : vector<32x16xf32>
    %c0_5 = arith.constant 0 : index
    %c32 = arith.constant 32 : index
    %10 = vector.load %arg4[%c0_5, %c32] : memref<32x64xf32, #tpu.memory_space<vmem>>, vector<32x16xf32>
    tpu.vector_store %arg4[%c0_5, %c32], %9 {strides = array<i32>} : memref<32x64xf32, #tpu.memory_space<vmem>>, vector<32x16xf32>,
    %11 = arith.mulf %1, %9 : vector<32x16xf32>
    %12 = arith.addf %11, %6 : vector<32x16xf32>
    %c0_6 = arith.constant 0 : index
    %c48 = arith.constant 48 : index
    %13 = vector.load %arg4[%c0_6, %c48] : memref<32x64xf32, #tpu.memory_space<vmem>>, vector<32x16xf32>
    tpu.vector_store %arg4[%c0_6, %c48], %12 {strides = array<i32>} : memref<32x64xf32, #tpu.memory_space<vmem>>, vector<32x16xf32>,
    %c0_7 = arith.constant 0 : index
    %c0_8 = arith.constant 0 : index
    %14 = vector.load %arg4[%c0_7, %c0_8] : memref<32x64xf32, #tpu.memory_space<vmem>>, vector<32x64xf32>
    %c0_9 = arith.constant 0 : index
    %c0_10 = arith.constant 0 : index
    %15 = vector.load %arg2[%c0_9, %c0_10] : memref<64x32xf32, #tpu.memory_space<vmem>>, vector<64x32xf32>
    %cst_11 = arith.constant dense<0.000000e+00> : vector<32x32xf32>
    %16 = tpu.matmul %14, %15, %cst_11 {dimension_numbers = #tpu.dot_dimension_numbers<[1], [0], [0], [1], [0, 0, 1, 1], [], []>} : vector<32x64xf32>, vector<64x32xf32>, vector<32x32xf32> -> vector<32x32xf32>
    %c0_12 = arith.constant 0 : index
    %c0_13 = arith.constant 0 : index
    %17 = vector.load %arg3[%c0_12, %c0_13] : memref<32x32xf32, #tpu.memory_space<vmem>>, vector<32x32xf32>
    tpu.vector_store %arg3[%c0_12, %c0_13], %16 {strides = array<i32>} : memref<32x32xf32, #tpu.memory_space<vmem>>, vector<32x32xf32>,
    return
  }
  func.func @transform_0(%arg0: i32) -> (i32, i32) {
    %c0_i32 = arith.constant 0 : i32
    %c0_i32_0 = arith.constant 0 : i32
    return %arg0, %c0_i32 : i32, i32
  }
  func.func @transform_1(%arg0: i32) -> (i32, i32) {
    %c0_i32 = arith.constant 0 : i32
    %c0_i32_0 = arith.constant 0 : i32
    %c0_i32_1 = arith.constant 0 : i32
    return %c0_i32, %c0_i32_0 : i32, i32
  }
  func.func @transform_2(%arg0: i32) -> (i32, i32) {
    %c0_i32 = arith.constant 0 : i32
    %c0_i32_0 = arith.constant 0 : i32
    return %arg0, %c0_i32 : i32, i32
  }
}

</mosaic_0001>

<llo_original>
// kernel: fibonacci_kan_layer.1
$region0: #{fibonacci_kan_layer.1}
  #allocation0 [shape = 'u32[]', space=smem, size = 0x4, offset = 0x4, fixed_abs, tag = 'smem constant byte address 0x4 - core index']
  #allocation1 [shape = 'u32[144,128]{1,0:T(1,128)}', space=vmem, size = 0x12000, scoped, tag = 'internal scratch']
  #allocation2 [shape = 'f32[32,64]{1,0:T(8,128)}', space=vmem, size = 0x4000, scoped, tag = 'scratch operand']
  %s0 = inlined_call_operand.vmem [shape: f32[32,16], index: 0, kind: input, shape index: {}]
  %s1 = inlined_call_operand.vmem [shape: f32[64,32], index: 1, kind: input, shape index: {}]
  %s2 = inlined_call_operand.hbm [shape: f32[32,32], index: 2, kind: output, shape index: {}]
  %s3 = sld [smem:[#allocation0]]
  $region18: #{fibonacci_kan_layer.1} parent=0
    _
  %s5 = ssub.s32 1, %s3
  %s6 = scalar_select 0, %s5, %s3
  $region1: #{fibonacci_kan_layer.1} parent=0
    #allocation3 [shape = 'u8[16384]{0}', space=vmem, size = 0x4000, scoped, tag = 'output window, operand 0, single buffered']
    #allocation4 [shape = 's32[1]{0}', space=sflag, size = 0x4, scoped, tag = 'scoped memory for fibonacci_kan_layer.1']
    %7 = vsyncpa [#allocation4], 0
    // Predicated region
    $region2: #{fibonacci_kan_layer.1} parent=1 // pred_check
      _
    $region3: #{fibonacci_kan_layer.1} parent=1 // pred_check_branch
      %9 = sbr.rel (0) target = $region5
    $region4: #{fibonacci_kan_layer.1} parent=1 // pred_region
      _
    $region5: #{fibonacci_kan_layer.1} parent=1 // pred_fallthru
      _
    // Predicated region
    $region6: #{fibonacci_kan_layer.1} parent=1 // pred_check
      _
    $region7: #{fibonacci_kan_layer.1} parent=1 // pred_check_branch
      %11 = sbr.rel (0) target = $region9
    $region8: #{fibonacci_kan_layer.1} parent=1 // pred_region
      _
    $region9: #{fibonacci_kan_layer.1} parent=1 // pred_fallthru
      _
    %v12 = vld [vmem:[%s0] sm:$0xff]
    %v13 = vld [vmem:[%s0 + $0x8] sm:$0xff]
    %v14 = vld [vmem:[%s0 + $0x10] sm:$0xff]
    %v15 = vld [vmem:[%s0 + $0x18] sm:$0xff]
    %v16 = vtanh.pop %v12
    %v17 = vtanh.pop %v13
    %v18 = vtanh.pop %v14
    %v19 = vtanh.pop %v15
    %vm20 = vcmask 130048
    %21 = vst.msk [vmem:[#allocation2] sm:$0xff] %vm20, 1.0
    %22 = vst.msk [vmem:[#allocation2 + $0x8] sm:$0xff] %vm20, 1.0
    %23 = vst.msk [vmem:[#allocation2 + $0x10] sm:$0xff] %vm20, 1.0
    %24 = vst.msk [vmem:[#allocation2 + $0x18] sm:$0xff] %vm20, 1.0
    %v25 = vadd.f32 %v16, 0.0
    %v26 = vadd.f32 %v17, 0.0
    %v27 = vadd.f32 %v18, 0.0
    %v28 = vadd.f32 %v19, 0.0
    %33 = vrot.lane.b32.xlu0 %v25, 16
    %v34 = vpop.permute.xlu0 %33
    %35 = vrot.lane.b32.xlu0 %v26, 16
    %v36 = vpop.permute.xlu0 %35
    %37 = vrot.lane.b32.xlu0 %v27, 16
    %v38 = vpop.permute.xlu0 %37
    %39 = vrot.lane.b32.xlu0 %v28, 16
    %v40 = vpop.permute.xlu0 %39
    %vm45 = vcmask 261248
    %46 = vst.msk [vmem:[#allocation2] sm:$0xff] %vm45, %v34
    %47 = vst.msk [vmem:[#allocation2 + $0x8] sm:$0xff] %vm45, %v36
    %48 = vst.msk [vmem:[#allocation2 + $0x10] sm:$0xff] %vm45, %v38
    %49 = vst.msk [vmem:[#allocation2 + $0x18] sm:$0xff] %vm45, %v40
    %v50 = vmul.f32 %v16, %v25
    %v51 = vmul.f32 %v17, %v26
    %v52 = vmul.f32 %v18, %v27
    %v53 = vmul.f32 %v19, %v28
    %v54 = vadd.f32 %v50, 1.0
    %v55 = vadd.f32 %v51, 1.0
    %v56 = vadd.f32 %v52, 1.0
    %v57 = vadd.f32 %v53, 1.0
    %62 = vrot.lane.b32.xlu0 %v54, 32
    %v63 = vpop.permute.xlu0 %62
    %64 = vrot.lane.b32.xlu0 %v55, 32
    %v65 = vpop.permute.xlu0 %64
    %66 = vrot.lane.b32.xlu0 %v56, 32
    %v67 = vpop.permute.xlu0 %66
    %68 = vrot.lane.b32.xlu0 %v57, 32
    %v69 = vpop.permute.xlu0 %68
    %vm74 = vcmask 392448
    %75 = vst.msk [vmem:[#allocation2] sm:$0xff] %vm74, %v63
    %76 = vst.msk [vmem:[#allocation2 + $0x8] sm:$0xff] %vm74, %v65
    %77 = vst.msk [vmem:[#allocation2 + $0x10] sm:$0xff] %vm74, %v67
    %78 = vst.msk [vmem:[#allocation2 + $0x18] sm:$0xff] %vm74, %v69
    %v79 = vmul.f32 %v16, %v54
    %v80 = vmul.f32 %v17, %v55
    %v81 = vmul.f32 %v18, %v56
    %v82 = vmul.f32 %v19, %v57
    %v83 = vadd.f32 %v79, %v25
    %v84 = vadd.f32 %v80, %v26
    %v85 = vadd.f32 %v81, %v27
    %v86 = vadd.f32 %v82, %v28
    %91 = vrot.lane.b32.xlu0 %v83, 48
    %v92 = vpop.permute.xlu0 %91
    %93 = vrot.lane.b32.xlu0 %v84, 48
    %v94 = vpop.permute.xlu0 %93
    %95 = vrot.lane.b32.xlu0 %v85, 48
    %v96 = vpop.permute.xlu0 %95
    %97 = vrot.lane.b32.xlu0 %v86, 48
    %v98 = vpop.permute.xlu0 %97
    %vm103 = vcmask 523648
    %104 = vst.msk [vmem:[#allocation2] sm:$0xff] %vm103, %v92
    %105 = vst.msk [vmem:[#allocation2 + $0x8] sm:$0xff] %vm103, %v94
    %106 = vst.msk [vmem:[#allocation2 + $0x10] sm:$0xff] %vm103, %v96
    %107 = vst.msk [vmem:[#allocation2 + $0x18] sm:$0xff] %vm103, %v98
    %v108 = vld [vmem:[#allocation2] sm:$0xff]
    %v109 = vld [vmem:[#allocation2 + $0x8] sm:$0xff]
    %v110 = vld [vmem:[#allocation2 + $0x10] sm:$0xff]
    %v111 = vld [vmem:[#allocation2 + $0x18] sm:$0xff]
    %v112 = vld [vmem:[%s1] sm:$0xff]
    %v113 = vld [vmem:[%s1 + $0x8] sm:$0xff]
    %v114 = vld [vmem:[%s1 + $0x10] sm:$0xff]
    %v115 = vld [vmem:[%s1 + $0x18] sm:$0xff]
    %v116 = vld [vmem:[%s1 + $0x20] sm:$0xff]
    %v117 = vld [vmem:[%s1 + $0x28] sm:$0xff]
    %v118 = vld [vmem:[%s1 + $0x30] sm:$0xff]
    %v119 = vld [vmem:[%s1 + $0x38] sm:$0xff]
    %vm120 = vcmask 523264
    %v122 = vsel %vm120, %v108, 0
    %v125 = vsel %vm120, %v109, 0
    %v128 = vsel %vm120, %v110, 0
    %v131 = vsel %vm120, %v111, 0
    %133 = vmatprep.subr.mxu0 0.0
    %134 = vmatpush1.msra.mxu0 %v112
    %135 = vmatprep.subr.mxu0 0.0
    %136 = vmatpush1.msra.mxu0 %v113
    %137 = vmatprep.subr.mxu0 0.0
    %138 = vmatpush1.msra.mxu0 %v114
    %139 = vmatprep.subr.mxu0 0.0
    %140 = vmatpush1.msra.mxu0 %v115
    %141 = vmatprep.subr.mxu0 0.0
    %142 = vmatpush1.msra.mxu0 %v116
    %143 = vmatprep.subr.mxu0 0.0
    %144 = vmatpush1.msra.mxu0 %v117
    %145 = vmatprep.subr.mxu0 0.0
    %146 = vmatpush1.msra.mxu0 %v118
    %147 = vmatprep.subr.mxu0 0.0
    %148 = vmatpush1.msra.mxu0 %v119
    %149 = vmatprep.subr.mxu0 0.0
    %150 = vmatpush1.msra.mxu0 0.0
    %151 = vmatprep.subr.mxu0 0.0
    %152 = vmatpush1.msra.mxu0 0.0
    %153 = vmatprep.subr.mxu0 0.0
    %154 = vmatpush1.msra.mxu0 0.0
    %155 = vmatprep.subr.mxu0 0.0
    %156 = vmatpush1.msra.mxu0 0.0
    %157 = vmatprep.subr.mxu0 0.0
    %158 = vmatpush1.msra.mxu0 0.0
    %159 = vmatprep.subr.mxu0 0.0
    %160 = vmatpush1.msra.mxu0 0.0
    %161 = vmatprep.subr.mxu0 0.0
    %162 = vmatpush1.msra.mxu0 0.0
    %163 = vmatprep.subr.mxu0 0.0
    %164 = vmatpush1.msra.mxu0 0.0
    %165 = vmatprep.subr.mxu0 0.0
    %166 = vmatpush1.msra.mxu0 0.0
    %167 = vmatprep.subr.mxu0 0.0
    %168 = vmatpush1.msra.mxu0 0.0
    %169 = vmatprep.subr.mxu0 0.0
    %170 = vmatpush1.msra.mxu0 0.0
    %171 = vmatprep.subr.mxu0 0.0
    %172 = vmatpush1.msra.mxu0 0.0
    %173 = vmatprep.subr.mxu0 0.0
    %174 = vmatpush1.msra.mxu0 0.0
    %175 = vmatprep.subr.mxu0 0.0
    %176 = vmatpush1.msra.mxu0 0.0
    %177 = vmatprep.subr.mxu0 0.0
    %178 = vmatpush1.msra.mxu0 0.0
    %179 = vmatprep.subr.mxu0 0.0
    %180 = vmatpush1.msra.mxu0 0.0
    %181 = vmatprep.subr.mxu0 0.0
    %182 = vmatpush1.msra.mxu0 0.0
    %183 = vmatprep.subr.mxu0 0.0
    %184 = vmatpush1.msra.mxu0 0.0
    %185 = vmatprep.subr.mxu0 0.0
    %186 = vmatpush1.msra.mxu0 0.0
    %187 = vmatprep.subr.mxu0 0.0
    %188 = vmatpush1.msra.mxu0 0.0
    %189 = vmatprep.subr.mxu0 0.0
    %190 = vmatpush1.msra.mxu0 0.0
    %191 = vmatprep.subr.mxu0 0.0
    %192 = vmatpush1.msra.mxu0 0.0
    %193 = vmatprep.subr.mxu0 0.0
    %194 = vmatpush1.msra.mxu0 0.0
    %195 = vmatprep.subr.mxu0 0.0
    %196 = vmatpush1.msra.mxu0 0.0
    %197 = vmatprep.mubr.f32.mxu0 0.0
    %198 = vmatmul.mubr.f32.gmra.mrb[0].mxu0 %v122
    %v199 = vpop.f32.mrb[0].mxu0
    %v200 = vadd.f32 0.0, %v199
    %v201 = vpop.f32.mrb[0].mxu0
    %202 = vmatprep.mubr.f32.mxu0 0.0
    %203 = vmatmul.mubr.f32.gmra.mrb[0].mxu0 %v125
    %v204 = vpop.f32.mrb[0].mxu0
    %v205 = vadd.f32 0.0, %v204
    %v206 = vpop.f32.mrb[0].mxu0
    %207 = vmatprep.mubr.f32.mxu0 0.0
    %208 = vmatmul.mubr.f32.gmra.mrb[0].mxu0 %v128
    %v209 = vpop.f32.mrb[0].mxu0
    %v210 = vadd.f32 0.0, %v209
    %v211 = vpop.f32.mrb[0].mxu0
    %212 = vmatprep.mubr.f32.mxu0 0.0
    %213 = vmatmul.mubr.f32.gmra.mrb[0].mxu0 %v131
    %v214 = vpop.f32.mrb[0].mxu0
    %v215 = vadd.f32 0.0, %v214
    %v216 = vpop.f32.mrb[0].mxu0
    %217 = vdwg.mxu0
    %vm218 = vcmask 261120
    %219 = vst.msk [vmem:[#allocation3] sm:$0xff] %vm218, %v200
    %220 = vst.msk [vmem:[#allocation3 + $0x8] sm:$0xff] %vm218, %v205
    %221 = vst.msk [vmem:[#allocation3 + $0x10] sm:$0xff] %vm218, %v210
    %222 = vst.msk [vmem:[#allocation3 + $0x18] sm:$0xff] %vm218, %v215
    // Predicated region
    $region10: #{fibonacci_kan_layer.1} parent=1 // pred_check
      _
    $region11: #{fibonacci_kan_layer.1} parent=1 // pred_check_branch
      %224 = sbr.rel (0) target = $region13
    $region12: #{fibonacci_kan_layer.1} parent=1 // pred_region
      %s226 = ssub.s32 512, 512
      %227 = vsyncadd [#allocation4], %s226
      %s228 = sshll.u32 [#allocation3], 4
      %s229 = int_to_ptr.vmem [resolvable:$true] %s228
      %234 = dma.vmem_to_hbm [thread:$0]  %s229, 512, %s2, [#allocation4], 128, 128, 8
    $region13: #{fibonacci_kan_layer.1} parent=1 // pred_fallthru
      _
    // Predicated region
    $region14: #{fibonacci_kan_layer.1} parent=1 // pred_check
      _
    $region15: #{fibonacci_kan_layer.1} parent=1 // pred_check_branch
      %236 = sbr.rel (0) target = $region17
    $region16: #{fibonacci_kan_layer.1} parent=1 // pred_region
      %237 = dma.done [#allocation4], 512
    $region17: #{fibonacci_kan_layer.1} parent=1 // pred_fallthru
      _
    %238 = vsyncpa [#allocation4], 1

</llo_original>
